<compile_context>
chip_gen: v6e
topology: v6e:2x2x1
jax: 0.10.0
libtpu: 0.0.40
codegen_flags: <defaults>
</compile_context>

<pallas_src>
import functools

import jax
import jax.numpy as jnp
from jax.experimental import pallas as pl
from jax.experimental.pallas import tpu as pltpu


def _label_smoothing_kernel(x_ref, t_ref, o_ref, *, confidence, smoothing,
                            n_rows, n_cols, tile_n, row_ragged):
    # x_ref: (tile_n, C) logits (native dtype); t_ref: (tile_n, 1) int32 targets;
    # o_ref: (8, 128) f32 per-tile partial-sum slab (independent block per step).
    i = pl.program_id(0)

    x = x_ref[...]                                   # (tile_n, C), native dtype
    t = t_ref[...]                                   # (tile_n, 1) int32
    col = jax.lax.broadcasted_iota(jnp.int32, x.shape, 1)

    # Stable logsumexp over the class axis (full-C block -> no column masking).
    m = jnp.max(x, axis=-1, keepdims=True)                              # (tile_n, 1)
    e = jnp.exp((x - m).astype(jnp.float32))                            # f32 exp (EUP)
    lse = m.astype(jnp.float32) + jnp.log(jnp.sum(e, axis=-1, keepdims=True))

    # Fused gather + smoothing mean:
    #   conf*x[t] + (smooth/C)*sum(x) == sum_c (smooth/C + conf*[c==t]) * x[c]
    sc = smoothing / n_cols
    w = jnp.where(col == t, confidence + sc, sc)                        # f32 weights
    weighted = jnp.sum(w * x.astype(jnp.float32), axis=-1, keepdims=True)

    row_loss = lse - weighted                                           # (tile_n, 1) f32

    if row_ragged:
        # Ragged last tile: boundary-block rows beyond n_rows hold undefined data.
        row = i * tile_n + jax.lax.broadcasted_iota(jnp.int32, (tile_n, 1), 0)
        row_loss = jnp.where(row < n_rows, row_loss, 0.0)

    psum = jnp.sum(row_loss)                                            # scalar f32

    # Write the per-tile partial sum at [0, 0] of a lane-aligned (8, 128) slab so
    # the grid axis can be "parallel" (v7x dual TensorCore) with unmasked stores.
    r = jax.lax.broadcasted_iota(jnp.int32, (8, 128), 0)
    c = jax.lax.broadcasted_iota(jnp.int32, (8, 128), 1)
    o_ref[...] = jnp.where((r == 0) & (c == 0), psum, 0.0)


def label_smoothing_loss(x, target, smoothing=0.1, tile_n=None):
    """x: (N, C) float logits, target: (N,) int labels -> scalar f32 loss."""
    n, c = x.shape
    confidence = 1.0 - smoothing
    itemsize = jnp.dtype(x.dtype).itemsize

    # Generation-aware scoped VMEM: ~48 MiB on 64 MiB parts (v7x), ~96 MiB on
    # 128 MiB parts (v5e/v6e).  Leaves headroom for output block + scratch.
    try:
        vmem_cap = int(getattr(pltpu.get_tpu_info(), "vmem_capacity_bytes",
                               64 * 2**20))
    except Exception:
        vmem_cap = 64 * 2**20
    vmem_limit = 48 * 2**20 if vmem_cap <= 64 * 2**20 else 96 * 2**20

    if tile_n is None:
        # ~1/8 of the scoped limit per x buffer: covers the double-buffered x
        # tile, the int32 target buffer and f32 intermediates (incl. bf16 inputs).
        buf_budget = vmem_limit // 8
        tile_n = max(8, (buf_budget // max(1, c * itemsize)) // 8 * 8)
    tile_n = max(8, (int(tile_n) // 8) * 8)
    if n < 8:
        tile_n = n                       # block dim equal to the full array dim
    else:
        tile_n = min(tile_n, (n // 8) * 8)

    grid_n = pl.cdiv(n, tile_n)
    t2d = target.astype(jnp.int32).reshape(n, 1)

    kernel = functools.partial(
        _label_smoothing_kernel,
        confidence=float(confidence), smoothing=float(smoothing),
        n_rows=n, n_cols=c, tile_n=tile_n, row_ragged=(n % tile_n != 0),
    )

    cost = pl.CostEstimate(
        flops=6 * n * c,
        transcendentals=n * c,
        bytes_accessed=n * c * itemsize + n * 4 + grid_n * 8 * 128 * 4,
    )

    partial = pl.pallas_call(
        kernel,
        out_shape=jax.ShapeDtypeStruct((grid_n * 8, 128), jnp.float32),
        grid_spec=pltpu.PrefetchScalarGridSpec(
            num_scalar_prefetch=0,
            grid=(grid_n,),
            in_specs=[
                pl.BlockSpec((tile_n, c), lambda i: (i, 0)),
                pl.BlockSpec((tile_n, 1), lambda i: (i, 0)),
            ],
            out_specs=pl.BlockSpec((8, 128), lambda i: (i, 0)),
        ),
        compiler_params=pltpu.CompilerParams(
            dimension_semantics=("parallel",),   # per-tile partials, no carry
            vmem_limit_bytes=int(vmem_limit),
        ),
        cost_estimate=cost,
    )(x, t2d)

    # Final reduction over per-tile partials (tiny) in plain JAX.
    return jnp.sum(partial) / n


def _reference(x, target, smoothing=0.1):
    confidence = 1.0 - smoothing
    logprobs = jax.nn.log_softmax(x.astype(jnp.float32), axis=-1)
    nll = -jnp.take_along_axis(logprobs, target[:, None], axis=-1)[:, 0]
    smooth = -jnp.mean(logprobs, axis=-1)
    return jnp.mean(confidence * nll + smoothing * smooth)


if __name__ == "__main__":
    key = jax.random.PRNGKey(0)
    kx, kt = jax.random.split(key)
    # N not a multiple of the row tile, C not a multiple of 128 -> exercises the
    # ragged boundary block and the full-C (unpadded) class axis.
    N, C = 30, 32
    x = jax.random.normal(kx, (N, C), dtype=jnp.float32)
    target = jax.random.randint(kt, (N,), 0, C, dtype=jnp.int32)

    smoothing = 0.1
    loss = label_smoothing_loss(x, target, smoothing=smoothing)
    jax.block_until_ready(loss)

    ref = _reference(x, target, smoothing=smoothing)
    assert jnp.allclose(loss, ref, atol=1e-5, rtol=1e-5), (loss, ref)
    print("KERNEL_OK")
</pallas_src>

<mosaic_0001>
module attributes {stable_mosaic.version = 11 : i64} {
  func.func @_label_smoothing_kernel(%arg0: i32, %arg1: memref<24x32xf32, #tpu.memory_space<vmem>>, %arg2: memref<24x1xi32, #tpu.memory_space<vmem>>, %arg3: memref<8x128xf32, #tpu.memory_space<vmem>>) attributes {dimension_semantics = [#tpu.dimension_semantics<parallel>], iteration_bounds = array<i64: 2>, scalar_prefetch = 0 : i64, scratch_operands = 0 : i64, tpu.core_type = #tpu.core_type<tc>, window_params = [{transform_indices = @transform_0, window_bounds = array<i64: 24, 32>}, {transform_indices = @transform_1, window_bounds = array<i64: 24, 1>}, {transform_indices = @transform_2, window_bounds = array<i64: 8, 128>}]} {
    %c0 = arith.constant 0 : index
    %c0_0 = arith.constant 0 : index
    %0 = vector.load %arg1[%c0, %c0_0] : memref<24x32xf32, #tpu.memory_space<vmem>>, vector<24x32xf32>
    %c0_1 = arith.constant 0 : index
    %c0_2 = arith.constant 0 : index
    %1 = vector.load %arg2[%c0_1, %c0_2] : memref<24x1xi32, #tpu.memory_space<vmem>>, vector<24x1xi32>
    %2 = tpu.iota {dimensions = array<i32: 1>} : vector<24x32xi32>
    %cst = arith.constant dense<0xFF800000> : vector<24xf32>
    %3 = vector.multi_reduction <maximumf>, %0, %cst [1] : vector<24x32xf32> to vector<24xf32>
    %4 = vector.shape_cast %3 : vector<24xf32> to vector<24x1xf32>
    %5 = vector.broadcast %4 : vector<24x1xf32> to vector<24x32xf32>
    %6 = arith.subf %0, %5 : vector<24x32xf32>
    %7 = math.exp %6 : vector<24x32xf32>
    %cst_3 = arith.constant dense<0.000000e+00> : vector<24xf32>
    %8 = vector.multi_reduction <add>, %7, %cst_3 [1] : vector<24x32xf32> to vector<24xf32>
    %9 = vector.shape_cast %8 : vector<24xf32> to vector<24x1xf32>
    %10 = math.log %9 : vector<24x1xf32>
    %11 = arith.addf %4, %10 : vector<24x1xf32>
    %12 = vector.broadcast %1 : vector<24x1xi32> to vector<24x32xi32>
    %13 = arith.cmpi eq, %2, %12 : vector<24x32xi32>
    %cst_4 = arith.constant 0.903124988 : f32
    %cst_5 = arith.constant 3.125000e-03 : f32
    %14 = vector.broadcast %cst_4 : f32 to vector<24x32xf32>
    %15 = vector.broadcast %cst_5 : f32 to vector<24x32xf32>
    %16 = arith.select %13, %14, %15 : vector<24x32xi1>, vector<24x32xf32>
    %17 = arith.mulf %16, %0 : vector<24x32xf32>
    %cst_6 = arith.constant dense<0.000000e+00> : vector<24xf32>
    %18 = vector.multi_reduction <add>, %17, %cst_6 [1] : vector<24x32xf32> to vector<24xf32>
    %19 = vector.shape_cast %18 : vector<24xf32> to vector<24x1xf32>
    %20 = arith.subf %11, %19 : vector<24x1xf32>
    %c24_i32 = arith.constant 24 : i32
    %21 = arith.muli %arg0, %c24_i32 : i32
    %22 = tpu.iota {dimensions = array<i32: 0>} : vector<24x1xi32>
    %23 = vector.broadcast %21 : i32 to vector<24x1xi32>
    %24 = arith.addi %23, %22 : vector<24x1xi32>
    %c30_i32 = arith.constant 30 : i32
    %25 = vector.broadcast %c30_i32 : i32 to vector<24x1xi32>
    %26 = arith.cmpi slt, %24, %25 : vector<24x1xi32>
    %cst_7 = arith.constant 0.000000e+00 : f32
    %27 = vector.broadcast %cst_7 : f32 to vector<24x1xf32>
    %28 = arith.select %26, %20, %27 : vector<24x1xi1>, vector<24x1xf32>
    %29 = vector.shape_cast %28 : vector<24x1xf32> to vector<1x24x1xf32>
    %cst_8 = arith.constant dense<0.000000e+00> : vector<1xf32>
    %30 = vector.multi_reduction <add>, %29, %cst_8 [1, 2] : vector<1x24x1xf32> to vector<1xf32>
    %31 = vector.shape_cast %30 : vector<1xf32> to vector<1x1x1xf32>
    %32 = vector.extract %31[0, 0, 0] : f32 from vector<1x1x1xf32>
    %33 = tpu.iota {dimensions = array<i32: 0>} : vector<8x128xi32>
    %34 = tpu.iota {dimensions = array<i32: 1>} : vector<8x128xi32>
    %c0_i32 = arith.constant 0 : i32
    %35 = vector.broadcast %c0_i32 : i32 to vector<8x128xi32>
    %36 = arith.cmpi eq, %33, %35 : vector<8x128xi32>
    %c0_i32_9 = arith.constant 0 : i32
    %37 = vector.broadcast %c0_i32_9 : i32 to vector<8x128xi32>
    %38 = arith.cmpi eq, %34, %37 : vector<8x128xi32>
    %39 = arith.andi %36, %38 : vector<8x128xi1>
    %cst_10 = arith.constant 0.000000e+00 : f32
    %40 = vector.broadcast %32 : f32 to vector<8x128xf32>
    %41 = vector.broadcast %cst_10 : f32 to vector<8x128xf32>
    %42 = arith.select %39, %40, %41 : vector<8x128xi1>, vector<8x128xf32>
    %c0_11 = arith.constant 0 : index
    %c0_12 = arith.constant 0 : index
    %43 = vector.load %arg3[%c0_11, %c0_12] : memref<8x128xf32, #tpu.memory_space<vmem>>, vector<8x128xf32>
    tpu.vector_store %arg3[%c0_11, %c0_12], %42 {strides = array<i32>} : memref<8x128xf32, #tpu.memory_space<vmem>>, vector<8x128xf32>,
    return
  }
  func.func @transform_0(%arg0: i32) -> (i32, i32) {
    %c0_i32 = arith.constant 0 : i32
    %c0_i32_0 = arith.constant 0 : i32
    return %arg0, %c0_i32 : i32, i32
  }
  func.func @transform_1(%arg0: i32) -> (i32, i32) {
    %c0_i32 = arith.constant 0 : i32
    %c0_i32_0 = arith.constant 0 : i32
    return %arg0, %c0_i32 : i32, i32
  }
  func.func @transform_2(%arg0: i32) -> (i32, i32) {
    %c0_i32 = arith.constant 0 : i32
    %c0_i32_0 = arith.constant 0 : i32
    return %arg0, %c0_i32 : i32, i32
  }
}

</mosaic_0001>

<llo_original>
// kernel: tpu_custom_call.1
$region0: #{tpu_custom_call.1}
  #allocation0 [shape = 'u32[]', space=smem, size = 0x4, offset = 0x4, fixed_abs, tag = 'smem constant byte address 0x4 - core index']
  #allocation1 [shape = 'u32[144,128]{1,0:T(1,128)}', space=vmem, size = 0x12000, scoped, tag = 'internal scratch']
  %s0 = inlined_call_operand.vmem [shape: f32[30,32], index: 0, kind: input, shape index: {}]
  %s1 = inlined_call_operand.vmem [shape: s32[30,1], index: 1, kind: input, shape index: {}]
  %s2 = inlined_call_operand.hbm [shape: f32[16,128], index: 2, kind: output, shape index: {}]
  %s3 = sld [smem:[#allocation0]]
  $region41: #{tpu_custom_call.1} parent=0
    _
  %s5 = ssub.s32 1, %s3
  %s6 = scalar_select 0, %s5, %s3
  $region1: #{tpu_custom_call.1} parent=0
    #allocation2 [shape = 'u8[8192]{0}', space=vmem, size = 0x2000, scoped, tag = 'output window, operand 0']
    #allocation3 [shape = 's32[2]{0}', space=sflag, size = 0x8, scoped, tag = 'scoped memory for tpu_custom_call.1']
    %7 = vsyncpa [#allocation3], 0
    %s8 = scalar_lea.sflag [#allocation3], 1
    %9 = vsyncpa %s8, 0
    loop: start=0, step=1, limit=4
    $region2: #{tpu_custom_call.1} parent=1 // loop_pre_header
      _
    $region3: #{tpu_custom_call.1} parent=1 // loop_header
      %s11 = sphi 0, %s15
      %p12 = scmp.ge.s32.totalorder %s11, 4
      %s21 = sphi 0, %s23
      %s24 = sphi 0, %s21
      %s25 = sphi 0, %s24
      %s41 = sphi 0, %s25
      %s47 = sphi 0, %s49
      %s50 = sphi 0, %s47
      %s51 = sphi 0, %s50
      %s67 = sphi 0, %s51
      %s73 = sphi 0, %s75
      %s76 = sphi 0, %s73
      %s77 = sphi 0, %s76
      %s93 = sphi 0, %s77
    $region4: #{tpu_custom_call.1} parent=1 // loop_header_branch
      %14 = sbr.rel (%p12) target = $region8
    $region5: #{tpu_custom_call.1} parent=1 // loop_body
      %s16 = ssub.s32 %s11, 1
      %s17 = ssub.s32 %s11, 2
      %s18 = sadd.s32 %s11, 1
      %s19 = ssub.s32 %s11, %s18
      %p20 = scmp.eq.s32.totalorder %s19, 0
      %s22 = sadd.s32 %s21, 1
      %s23 = scalar_select %p20, %s21, %s22
      %p26 = pneg %p20
      %p27 = scmp.eq.s32.totalorder %s11, 1
      %p28 = por %p26, %p27
      %p29 = scmp.ne.s32.totalorder %s21, %s24
      %p30 = scmp.eq.s32.totalorder %s11, 0
      %p31 = por %p29, %p30
      %p32 = scmp.ne.s32.totalorder %s21, %s24
      %p33 = scmp.eq.s32.totalorder %s16, 1
      %p34 = por %p32, %p33
      %p35 = scmp.ne.s32.totalorder %s24, %s25
      %p36 = scmp.eq.s32.totalorder %s16, 0
      %p37 = por %p35, %p36
      %p38 = scmp.ne.s32.totalorder %s24, %s25
      %p39 = scmp.eq.s32.totalorder %s17, 1
      %p40 = por %p38, %p39
      %p42 = scmp.ne.s32.totalorder %s25, %s41
      %p43 = scmp.eq.s32.totalorder %s17, 0
      %p44 = por %p42, %p43
      %s45 = ssub.s32 %s11, %s18
      %p46 = scmp.eq.s32.totalorder %s45, 0
      %s48 = sadd.s32 %s47, 1
      %s49 = scalar_select %p46, %s47, %s48
      %p52 = pneg %p46
      %p53 = scmp.eq.s32.totalorder %s11, 1
      %p54 = por %p52, %p53
      %p55 = scmp.ne.s32.totalorder %s47, %s50
      %p56 = scmp.eq.s32.totalorder %s11, 0
      %p57 = por %p55, %p56
      %p58 = scmp.ne.s32.totalorder %s47, %s50
      %p59 = scmp.eq.s32.totalorder %s16, 1
      %p60 = por %p58, %p59
      %p61 = scmp.ne.s32.totalorder %s50, %s51
      %p62 = scmp.eq.s32.totalorder %s16, 0
      %p63 = por %p61, %p62
      %p64 = scmp.ne.s32.totalorder %s50, %s51
      %p65 = scmp.eq.s32.totalorder %s17, 1
      %p66 = por %p64, %p65
      %p68 = scmp.ne.s32.totalorder %s51, %s67
      %p69 = scmp.eq.s32.totalorder %s17, 0
      %p70 = por %p68, %p69
      %s71 = ssub.s32 %s11, %s18
      %p72 = scmp.eq.s32.totalorder %s71, 0
      %s74 = sadd.s32 %s73, 1
      %s75 = scalar_select %p72, %s73, %s74
      %p78 = pneg %p72
      %p79 = scmp.eq.s32.totalorder %s11, 1
      %p80 = por %p78, %p79
      %p81 = scmp.ne.s32.totalorder %s73, %s76
      %p82 = scmp.eq.s32.totalorder %s11, 0
      %p83 = por %p81, %p82
      %p84 = scmp.ne.s32.totalorder %s73, %s76
      %p85 = scmp.eq.s32.totalorder %s16, 1
      %p86 = por %p84, %p85
      %p87 = scmp.ne.s32.totalorder %s76, %s77
      %p88 = scmp.eq.s32.totalorder %s16, 0
      %p89 = por %p87, %p88
      %p90 = scmp.ne.s32.totalorder %s76, %s77
      %p91 = scmp.eq.s32.totalorder %s17, 1
      %p92 = por %p90, %p91
      %p94 = scmp.ne.s32.totalorder %s77, %s93
      %p95 = scmp.eq.s32.totalorder %s17, 0
      %p96 = por %p94, %p95
      %p97 = scmp.le.s32.totalorder 1, %s11
      %p98 = scmp.lt.s32.totalorder %s11, 3
      %p99 = pnand %p97, %p98
      %p100 = pneg %p99
      // Predicated region
      $region9: #{tpu_custom_call.1} parent=5 // pred_check
        _
      $region10: #{tpu_custom_call.1} parent=5 // pred_check_branch
        %102 = sbr.rel (%p99) target = $region12
      $region11: #{tpu_custom_call.1} parent=5 // pred_region
        %s103 = ssub.s32 %s11, 1
      $region12: #{tpu_custom_call.1} parent=5 // pred_fallthru
        _
      %p104 = scmp.lt.s32.totalorder %s11, 2
      // Predicated region
      $region13: #{tpu_custom_call.1} parent=5 // pred_check
        %p105 = pneg %p104
      $region14: #{tpu_custom_call.1} parent=5 // pred_check_branch
        %107 = sbr.rel (%p105) target = $region16
      $region15: #{tpu_custom_call.1} parent=5 // pred_region
        // Predicated region
        $region17: #{tpu_custom_call.1} parent=15 // pred_check
          %p108 = pneg %p31
        $region18: #{tpu_custom_call.1} parent=15 // pred_check_branch
          %110 = sbr.rel (%p108) target = $region20
        $region19: #{tpu_custom_call.1} parent=15 // pred_region
          %s111 = smul.u32 3, %s11
          %s112 = ssub.s32 4, %s111
          %p113 = scmp.lt.s32.totalorder %s112, 3
          %s114 = scalar_select %p113, %s112, 3
          %s115 = smul.u32 128, %s114
          %p116 = scmp.lt.s32.totalorder %s111, 3
          %s117 = scalar_select %p116, %s111, 3
          %s118 = smul.addr %s117, 8
          %s119 = scalar_lea.vmem %s0, %s118
          %s120 = smul.u32 3, %s11
          %s121 = ssub.s32 4, %s120
          %p122 = scmp.lt.s32.totalorder %s121, 3
          %s123 = scalar_select %p122, %s121, 3
          %s124 = smul.u32 128, %s123
        $region20: #{tpu_custom_call.1} parent=15 // pred_fallthru
          _
        // Predicated region
        $region21: #{tpu_custom_call.1} parent=15 // pred_check
          %p125 = pneg %p57
        $region22: #{tpu_custom_call.1} parent=15 // pred_check_branch
          %127 = sbr.rel (%p125) target = $region24
        $region23: #{tpu_custom_call.1} parent=15 // pred_region
          %s128 = smul.u32 3, %s11
          %s129 = ssub.s32 4, %s128
          %p130 = scmp.lt.s32.totalorder %s129, 3
          %s131 = scalar_select %p130, %s129, 3
          %s132 = smul.u32 128, %s131
          %p133 = scmp.lt.s32.totalorder %s128, 3
          %s134 = scalar_select %p133, %s128, 3
          %s135 = smul.addr %s134, 8
          %s136 = scalar_lea.vmem %s1, %s135
          %s137 = smul.u32 3, %s11
          %s138 = ssub.s32 4, %s137
          %p139 = scmp.lt.s32.totalorder %s138, 3
          %s140 = scalar_select %p139, %s138, 3
          %s141 = smul.u32 128, %s140
        $region24: #{tpu_custom_call.1} parent=15 // pred_fallthru
          _
      $region16: #{tpu_custom_call.1} parent=5 // pred_fallthru
        _
      %p142 = scmp.le.s32.totalorder 1, %s11
      %p143 = scmp.lt.s32.totalorder %s11, 3
      %p144 = pnand %p142, %p143
      %p145 = pneg %p144
      // Predicated region
      $region25: #{tpu_custom_call.1} parent=5 // pred_check
        _
      $region26: #{tpu_custom_call.1} parent=5 // pred_check_branch
        %147 = sbr.rel (%p144) target = $region28
      $region27: #{tpu_custom_call.1} parent=5 // pred_region
        %s148 = ssub.s32 %s11, 1
        %s149 = smul.u32 3, %s16
        %s150 = ssub.s32 4, %s149
        %p151 = scmp.lt.s32.totalorder %s150, 3
        %s152 = scalar_select %p151, %s150, 3
        %s153 = smul.u32 128, %s152
        %p154 = scmp.lt.s32.totalorder %s149, 3
        %s155 = scalar_select %p154, %s149, 3
        %s156 = smul.addr %s155, 8
        %s157 = scalar_lea.vmem %s0, %s156
        %p158 = pneg %p37
        %p159 = pneg %p34
        %s160 = smul.u32 3, %s16
        %s161 = ssub.s32 4, %s160
        %p162 = scmp.lt.s32.totalorder %s161, 3
        %s163 = scalar_select %p162, %s161, 3
        %s164 = smul.u32 128, %s163
        %p165 = scmp.lt.s32.totalorder %s160, 3
        %s166 = scalar_select %p165, %s160, 3
        %s167 = smul.addr %s166, 8
        %s168 = scalar_lea.vmem %s1, %s167
        %p169 = pneg %p63
        %p170 = pneg %p60
        %p171 = pneg %p89
        %p172 = pneg %p86
        %s173 = sand.u32 %s76, 1
        %s174 = scalar_lea.sflag [#allocation3], %s173
        %s175 = sand.u32 %s76, 1
        %s176 = smul.addr %s175, 8
        %s177 = scalar_lea.vmem [#allocation2], %s176
        %s178 = smul.u32 3, %s16
        %s179 = ssub.s32 4, %s178
        %p180 = scmp.lt.s32.totalorder %s179, 3
        %s181 = scalar_select %p180, %s179, 3
        %s182 = smul.u32 128, %s181
        %p183 = scmp.lt.s32.totalorder %s178, 3
        %s184 = scalar_select %p183, %s178, 3
        %s185 = smul.addr %s184, 8
        %s186 = scalar_lea.vmem %s0, %s185
        %s187 = smul.u32 3, %s16
        %s188 = ssub.s32 4, %s187
        %p189 = scmp.lt.s32.totalorder %s188, 3
        %s190 = scalar_select %p189, %s188, 3
        %s191 = smul.u32 128, %s190
        %s192 = smul.u32 3, %s16
        %s193 = ssub.s32 4, %s192
        %p194 = scmp.lt.s32.totalorder %s193, 3
        %s195 = scalar_select %p194, %s193, 3
        %s196 = smul.u32 128, %s195
        %p197 = scmp.lt.s32.totalorder %s192, 3
        %s198 = scalar_select %p197, %s192, 3
        %s199 = smul.addr %s198, 8
        %s200 = scalar_lea.vmem %s1, %s199
        %s201 = smul.u32 3, %s16
        %s202 = ssub.s32 4, %s201
        %p203 = scmp.lt.s32.totalorder %s202, 3
        %s204 = scalar_select %p203, %s202, 3
        %s205 = smul.u32 128, %s204
        %v206 = vld [vmem:[%s186] sm:$0xff]
        %v207 = vld [vmem:[%s186 + $0x8] sm:$0xff]
        %v208 = vld [vmem:[%s186 + $0x10] sm:$0xff]
        %v209 = vld [vmem:[%s200] sm:$0xff]
        %v210 = vld [vmem:[%s200 + $0x8] sm:$0xff]
        %v211 = vld [vmem:[%s200 + $0x10] sm:$0xff]
        %v212 = vlaneseq
        %v213 = vand.u32 %v212, 127
        %vm214 = vcmask 261120
        %v215 = vsel %vm214, %v206, -inf
        %216 = vmax.xlane.f32.xlu0 %v215
        %v217 = vpop.xlane.xlu0 %216
        %v218 = vsel %vm214, %v207, -inf
        %219 = vmax.xlane.f32.xlu0 %v218
        %v220 = vpop.xlane.xlu0 %219
        %v221 = vsel %vm214, %v208, -inf
        %222 = vmax.xlane.f32.xlu0 %v221
        %v223 = vpop.xlane.xlu0 %222
        %v224 = vsub.f32 %v206, %v217
        %v225 = vsub.f32 %v207, %v220
        %v226 = vsub.f32 %v208, %v223
        %v227 = vmul.f32 %v224, 1.442695
        %v228 = vpow.pop %v227
        %v229 = vmul.f32 %v225, 1.442695
        %v230 = vpow.pop %v229
        %v231 = vmul.f32 %v226, 1.442695
        %v232 = vpow.pop %v231
        %v233 = vsel %vm214, %v228, 0.0
        %234 = vadd.xlane.f32.xlu0 %v233
        %v235 = vpop.xlane.xlu0 %234
        %v236 = vsel %vm214, %v230, 0.0
        %237 = vadd.xlane.f32.xlu0 %v236
        %v238 = vpop.xlane.xlu0 %237
        %v239 = vsel %vm214, %v232, 0.0
        %240 = vadd.xlane.f32.xlu0 %v239
        %v241 = vpop.xlane.xlu0 %240
        %v242 = vlog2.pop %v235
        %v243 = vmul.f32 %v242, 0.6931472
        %v244 = vlog2.pop %v238
        %v245 = vmul.f32 %v244, 0.6931472
        %v246 = vlog2.pop %v241
        %v247 = vmul.f32 %v246, 0.6931472
        %v248 = vadd.f32 %v217, %v243
        %v249 = vadd.f32 %v220, %v245
        %v250 = vadd.f32 %v223, %v247
        %251 = vset.pattern.permute.xlu0 0
        %252 = vperm.xlu0 %251, %v209
        %v253 = vpop.permute.xlu0 %252
        %254 = vset.pattern.permute.xlu0 0
        %255 = vperm.xlu0 %254, %v210
        %v256 = vpop.permute.xlu0 %255
        %257 = vset.pattern.permute.xlu0 0
        %258 = vperm.xlu0 %257, %v211
        %v259 = vpop.permute.xlu0 %258
        %vm260 = vcmp.eq.s32.totalorder %v213, %v253
        %vm261 = vcmp.eq.s32.totalorder %v213, %v256
        %vm262 = vcmp.eq.s32.totalorder %v213, %v259
        %v263 = vsel %vm260, 0.903125, 0.003125
        %v264 = vsel %vm261, 0.903125, 0.003125
        %v265 = vsel %vm262, 0.903125, 0.003125
        %v266 = vmul.f32 %v263, %v206
        %v267 = vmul.f32 %v264, %v207
        %v268 = vmul.f32 %v265, %v208
        %v269 = vsel %vm214, %v266, 0.0
        %270 = vadd.xlane.f32.xlu0 %v269
        %v271 = vpop.xlane.xlu0 %270
        %v272 = vsel %vm214, %v267, 0.0
        %273 = vadd.xlane.f32.xlu0 %v272
        %v274 = vpop.xlane.xlu0 %273
        %v275 = vsel %vm214, %v268, 0.0
        %276 = vadd.xlane.f32.xlu0 %v275
        %v277 = vpop.xlane.xlu0 %276
        %v278 = vsub.f32 %v248, %v271
        %v279 = vsub.f32 %v249, %v274
        %v280 = vsub.f32 %v250, %v277
        %s281 = smul.u32 %s16, 24
        %v282 = vlaneseq
        %v283 = vshrl.u32 %v282, 7
        %v284 = vadd.s32 %v283, 8
        %v285 = vadd.s32 %v283, 16
        %v286 = vstv %s281
        %v287 = vadd.s32 %v286, %v283
        %v288 = vadd.s32 %v286, %v284
        %v289 = vadd.s32 %v286, %v285
        %vm290 = vcmp.lt.s32.totalorder %v287, 30
        %vm291 = vcmp.lt.s32.totalorder %v288, 30
        %vm292 = vcmp.lt.s32.totalorder %v289, 30
        %v293 = vsel %vm290, %v278, 0.0
        %v294 = vsel %vm291, %v279, 0.0
        %v295 = vsel %vm292, %v280, 0.0
        %vm296 = vcmask 7168
        %v297 = vsel %vm296, %v293, 0.0
        %v298 = vsel %vm296, %v294, 0.0
        %v299 = vadd.f32 %v297, %v298
        %v300 = vsel %vm296, %v295, 0.0
        %v301 = vadd.f32 %v299, %v300
        %302 = vadd.xlane.f32.xlu0 %v301
        %v303 = vpop.xlane.xlu0 %302
        %v304 = vrot.slane %v303, 4
        %v305 = vadd.f32 %v303, %v304
        %v306 = vrot.slane %v305, 2
        %v307 = vadd.f32 %v305, %v306
        %v308 = vrot.slane %v307, 1
        %v309 = vadd.f32 %v307, %v308
        %s310 = vtos %v309
        %vm311 = vcmp.eq.s32.totalorder %v283, 0
        %vm312 = vcmp.eq.s32.totalorder %v213, 0
        %vm313 = vmand %vm311, %vm312
        %v314 = vstv %s310
        %v315 = vsel %vm313, %v314, 0.0
        %316 = vst [vmem:[%s177] sm:$0xff] %v315
        %s317 = sand.u32 %s76, 1
        %s318 = scalar_lea.sflag [#allocation3], %s317
        %s319 = sand.u32 %s76, 1
        %s320 = smul.addr %s319, 8
        %s321 = scalar_lea.vmem [#allocation2], %s320
        // Predicated region
        $region29: #{tpu_custom_call.1} parent=27 // pred_check
          %p322 = pneg %p86
        $region30: #{tpu_custom_call.1} parent=27 // pred_check_branch
          %324 = sbr.rel (%p322) target = $region32
        $region31: #{tpu_custom_call.1} parent=27 // pred_region
          %s326 = ssub.s32 128, 128
          %327 = vsyncadd %s318, %s326
          %s328 = smul.addr %s16, 128
          %s329 = scalar_lea.hbm %s2, %s328
          %s331 = sshll.u32 %s321, 4
          %s332 = int_to_ptr.vmem [resolvable:$true] %s331
          %334 = dma.vmem_to_hbm [thread:$0]  %s332, 128, %s329, %s318
        $region32: #{tpu_custom_call.1} parent=27 // pred_fallthru
          _
      $region28: #{tpu_custom_call.1} parent=5 // pred_fallthru
        _
      %p335 = scmp.le.s32.totalorder 2, %s11
      // Predicated region
      $region33: #{tpu_custom_call.1} parent=5 // pred_check
        %p336 = pneg %p335
      $region34: #{tpu_custom_call.1} parent=5 // pred_check_branch
        %338 = sbr.rel (%p336) target = $region36
      $region35: #{tpu_custom_call.1} parent=5 // pred_region
        %s339 = ssub.s32 %s11, 2
        // Predicated region
        $region37: #{tpu_custom_call.1} parent=35 // pred_check
          %p340 = pneg %p92
        $region38: #{tpu_custom_call.1} parent=35 // pred_check_branch
          %342 = sbr.rel (%p340) target = $region40
        $region39: #{tpu_custom_call.1} parent=35 // pred_region
          %s343 = sand.u32 %s77, 1
          %s344 = scalar_lea.sflag [#allocation3], %s343
          %s345 = sand.u32 %s77, 1
          %s346 = smul.addr %s345, 8
          %s347 = scalar_lea.vmem [#allocation2], %s346
          %348 = dma.done %s344, 128
        $region40: #{tpu_custom_call.1} parent=35 // pred_fallthru
          _
      $region36: #{tpu_custom_call.1} parent=5 // pred_fallthru
        _
    $region6: #{tpu_custom_call.1} parent=1 // loop_footer
      %s15 = sadd.s32 1, %s11
    $region7: #{tpu_custom_call.1} parent=1 // loop_footer_branch
      %10 = sbr.rel target = $region3
    $region8: #{tpu_custom_call.1} parent=1 // loop_exit
      _
    %349 = vsyncpa [#allocation3], 1
    %s350 = scalar_lea.sflag [#allocation3], 1
    %351 = vsyncpa %s350, 1

</llo_original>
